<compile_context>
chip_gen: v6e
topology: v6e:2x2x1
jax: 0.10.0
libtpu: 0.0.40
codegen_flags: <defaults>
</compile_context>

<pallas_src>
import functools

import jax
import jax.numpy as jnp
from jax.experimental import pallas as pl
from jax.experimental.pallas import tpu as pltpu

IN_FEATURES = 100
OUT_FEATURES = 784   # 28 * 28
OUT_PADDED = 896     # 7 * 128 -> lane-padded MXU operand (weight only)


def _generator_kernel(z_ref, w_ref, b_ref, o_ref):
    # z_ref: (TB, 100)  w_ref: (100, 896)  b_ref: (1, 784)  o_ref: (TB, 784)
    y = jnp.dot(z_ref[...], w_ref[...], preferred_element_type=jnp.float32)
    # Store only the real 784 columns -> 12.5% fewer output HBM bytes and no
    # post-kernel slice pass.  Padded weight cols are never read back.
    o_ref[...] = jnp.tanh(y[:, :OUT_FEATURES] + b_ref[...]).astype(o_ref.dtype)


def prepare_params(weight, bias):
    """One-time conversion from torch layout to kernel layout.

    weight: (784, 100)  torch nn.Linear layout
    bias:   (784,)
    returns (w_pad (100, 896) zero-padded in cols 784:896, b (1, 784)).
    """
    w_t = jnp.transpose(weight).astype(jnp.float32)            # (100, 784)
    w_pad = jnp.zeros((IN_FEATURES, OUT_PADDED), jnp.float32)
    w_pad = w_pad.at[:, :OUT_FEATURES].set(w_t)
    b = bias.astype(jnp.float32).reshape(1, OUT_FEATURES)
    return w_pad, b


def _round_up(x, m):
    return ((x + m - 1) // m) * m


def _choose_block_b(B):
    """Batch tile size: aim for ~4 grid steps (>=2 always, >=2 per core under
    v7x megacore), multiple of 8, capped at 1024 rows (~7.5 MiB VMEM live,
    safe under the 32 MiB scoped default on v5e/v6e/v7x)."""
    blk = _round_up(pl.cdiv(B, 4), 8)
    return max(8, min(1024, blk))


@functools.partial(jax.jit, static_argnames=("block_b",))
def _generator_pallas(z, w_pad, b, block_b):
    B = z.shape[0]
    out = pl.pallas_call(
        _generator_kernel,
        out_shape=jax.ShapeDtypeStruct((B, OUT_FEATURES), jnp.float32),
        grid_spec=pl.GridSpec(
            grid=(pl.cdiv(B, block_b),),
            in_specs=[
                pl.BlockSpec((block_b, IN_FEATURES), lambda i: (i, 0)),
                # constant index_maps -> weight/bias DMA'd once, stay resident
                pl.BlockSpec((IN_FEATURES, OUT_PADDED), lambda i: (0, 0)),
                pl.BlockSpec((1, OUT_FEATURES), lambda i: (0, 0)),
            ],
            out_specs=pl.BlockSpec((block_b, OUT_FEATURES), lambda i: (i, 0)),
        ),
        compiler_params=pltpu.CompilerParams(
            dimension_semantics=("parallel",),
        ),
        cost_estimate=pl.CostEstimate(
            flops=2 * B * IN_FEATURES * OUT_FEATURES,
            transcendentals=B * OUT_FEATURES,
            bytes_accessed=(B * (IN_FEATURES + OUT_FEATURES) * 4
                            + (IN_FEATURES + 1) * OUT_PADDED * 4),
        ),
    )(z, w_pad, b)
    # (B, 784) -> (B, 1, 28, 28) is a free bitcast-style reshape.
    return out.reshape(-1, 1, 28, 28)


def generator_forward(z, w_pad, b, *, min_batch_for_kernel=128):
    """z: (B, 100) f32; params from prepare_params."""
    B = z.shape[0]
    if B < min_batch_for_kernel:
        # Tiny batches: fused XLA path beats kernel launch + grid overhead.
        y = jnp.tanh(z @ w_pad[:, :OUT_FEATURES] + b)
        return y.reshape(-1, 1, 28, 28)
    return _generator_pallas(z, w_pad, b, _choose_block_b(B))


def _init_params(key):
    """Deterministic init matching nn.Linear(100, 784) (torch layout)."""
    kw, kb = jax.random.split(key)
    bound = 1.0 / jnp.sqrt(jnp.float32(IN_FEATURES))
    weight = jax.random.uniform(
        kw, (OUT_FEATURES, IN_FEATURES), jnp.float32, -bound, bound)
    bias = jax.random.uniform(
        kb, (OUT_FEATURES,), jnp.float32, -bound, bound)
    return weight, bias


if __name__ == "__main__":
    key = jax.random.PRNGKey(0)
    k_params, k_z1, k_z2 = jax.random.split(key, 3)

    weight, bias = _init_params(k_params)          # torch layout
    w_pad, b = prepare_params(weight, bias)        # kernel layout (once)

    def reference(z):
        return jnp.tanh(z @ weight.T + bias).reshape(-1, 1, 28, 28)

    # 1) tiny batch -> fused XLA fallback path
    z_small = jax.random.normal(k_z1, (2, IN_FEATURES), dtype=jnp.float32)
    out_small = jax.block_until_ready(generator_forward(z_small, w_pad, b))
    assert out_small.shape == (2, 1, 28, 28), out_small.shape
    assert jnp.allclose(out_small, reference(z_small), atol=1e-5, rtol=1e-5)

    # 2) force the Pallas kernel path (block_b=8 -> 2 grid steps, exercises
    #    the pipelined multi-step path at a small test shape)
    z_k = jax.random.normal(k_z2, (16, IN_FEATURES), dtype=jnp.float32)
    out_k = jax.block_until_ready(
        generator_forward(z_k, w_pad, b, min_batch_for_kernel=1))
    assert out_k.shape == (16, 1, 28, 28), out_k.shape
    assert jnp.allclose(out_k, reference(z_k), atol=1e-5, rtol=1e-5)

    print("KERNEL_OK")
</pallas_src>

<mosaic_0001>
module attributes {stable_mosaic.version = 11 : i64} {
  func.func @_generator_kernel(%arg0: i32, %arg1: memref<8x100xf32, #tpu.memory_space<vmem>>, %arg2: memref<100x896xf32, #tpu.memory_space<vmem>>, %arg3: memref<1x784xf32, #tpu.memory_space<vmem>>, %arg4: memref<8x784xf32, #tpu.memory_space<vmem>>) attributes {dimension_semantics = [#tpu.dimension_semantics<parallel>], iteration_bounds = array<i64: 2>, scalar_prefetch = 0 : i64, scratch_operands = 0 : i64, tpu.core_type = #tpu.core_type<tc>, window_params = [{transform_indices = @transform_0, window_bounds = array<i64: 8, 100>}, {pipeline_mode = #tpu.pipeline_mode<synchronous>, transform_indices = @transform_1, window_bounds = array<i64: 100, 896>}, {pipeline_mode = #tpu.pipeline_mode<synchronous>, transform_indices = @transform_2, window_bounds = array<i64: 1, 784>}, {transform_indices = @transform_3, window_bounds = array<i64: 8, 784>}]} {
    %c0 = arith.constant 0 : index
    %c0_0 = arith.constant 0 : index
    %0 = vector.load %arg1[%c0, %c0_0] : memref<8x100xf32, #tpu.memory_space<vmem>>, vector<8x100xf32>
    %c0_1 = arith.constant 0 : index
    %c0_2 = arith.constant 0 : index
    %1 = vector.load %arg2[%c0_1, %c0_2] : memref<100x896xf32, #tpu.memory_space<vmem>>, vector<100x896xf32>
    %cst = arith.constant dense<0.000000e+00> : vector<8x896xf32>
    %2 = tpu.matmul %0, %1, %cst {dimension_numbers = #tpu.dot_dimension_numbers<[1], [0], [0], [1], [0, 0, 1, 1], [], []>} : vector<8x100xf32>, vector<100x896xf32>, vector<8x896xf32> -> vector<8x896xf32>
    %3 = vector.extract_strided_slice %2 {offsets = [0, 0], sizes = [8, 784], strides = [1, 1]} : vector<8x896xf32> to vector<8x784xf32>
    %c0_3 = arith.constant 0 : index
    %c0_4 = arith.constant 0 : index
    %4 = vector.load %arg3[%c0_3, %c0_4] : memref<1x784xf32, #tpu.memory_space<vmem>>, vector<1x784xf32>
    %5 = vector.broadcast %4 : vector<1x784xf32> to vector<8x784xf32>
    %6 = arith.addf %3, %5 : vector<8x784xf32>
    %7 = math.tanh %6 : vector<8x784xf32>
    %c0_5 = arith.constant 0 : index
    %c0_6 = arith.constant 0 : index
    %8 = vector.load %arg4[%c0_5, %c0_6] : memref<8x784xf32, #tpu.memory_space<vmem>>, vector<8x784xf32>
    tpu.vector_store %arg4[%c0_5, %c0_6], %7 {strides = array<i32>} : memref<8x784xf32, #tpu.memory_space<vmem>>, vector<8x784xf32>,
    return
  }
  func.func @transform_0(%arg0: i32) -> (i32, i32) {
    %c0_i32 = arith.constant 0 : i32
    %c0_i32_0 = arith.constant 0 : i32
    return %arg0, %c0_i32 : i32, i32
  }
  func.func @transform_1(%arg0: i32) -> (i32, i32) {
    %c0_i32 = arith.constant 0 : i32
    %c0_i32_0 = arith.constant 0 : i32
    %c0_i32_1 = arith.constant 0 : i32
    return %c0_i32, %c0_i32_0 : i32, i32
  }
  func.func @transform_2(%arg0: i32) -> (i32, i32) {
    %c0_i32 = arith.constant 0 : i32
    %c0_i32_0 = arith.constant 0 : i32
    %c0_i32_1 = arith.constant 0 : i32
    return %c0_i32, %c0_i32_0 : i32, i32
  }
  func.func @transform_3(%arg0: i32) -> (i32, i32) {
    %c0_i32 = arith.constant 0 : i32
    %c0_i32_0 = arith.constant 0 : i32
    return %arg0, %c0_i32 : i32, i32
  }
}

</mosaic_0001>

<llo_original>
// kernel: _generator_pallas.1
$region0: #{_generator_pallas.1}
  #allocation0 [shape = 'u32[]', space=smem, size = 0x4, offset = 0x4, fixed_abs, tag = 'smem constant byte address 0x4 - core index']
  #allocation1 [shape = 'u32[144,128]{1,0:T(1,128)}', space=vmem, size = 0x12000, scoped, tag = 'internal scratch']
  %s0 = inlined_call_operand.hbm [shape: f32[16,100], index: 0, kind: input, shape index: {}]
  %s1 = inlined_call_operand.hbm [shape: f32[100,896], index: 1, kind: input, shape index: {}]
  %s2 = inlined_call_operand.hbm [shape: f32[1,784], index: 2, kind: input, shape index: {}]
  %s3 = inlined_call_operand.vmem [shape: f32[16,784], index: 3, kind: output, shape index: {}]
  %s4 = sld [smem:[#allocation0]]
  $region57: #{_generator_pallas.1} parent=0
    _
  %s6 = ssub.s32 1, %s4
  %s7 = scalar_select 0, %s6, %s4
  $region1: #{_generator_pallas.1} parent=0
    #allocation2 [shape = 'u8[8192]{0}', space=vmem, size = 0x2000, scoped, tag = 'input window, operand 0']
    #allocation3 [shape = 's32[2]{0}', space=sflag, size = 0x8, scoped, tag = 'scoped memory for _generator_pallas.1']
    #allocation4 [shape = 'u8[372736]{0}', space=vmem, size = 0x5b000, scoped, tag = 'input window, operand 1, single buffered']
    #allocation5 [shape = 's32[1]{0}', space=sflag, size = 0x4, scoped, tag = 'scoped memory for _generator_pallas.1']
    #allocation6 [shape = 'u8[3584]{0}', space=vmem, size = 0x1000, scoped, tag = 'input window, operand 2, single buffered']
    %8 = vsyncpa [#allocation3], 0
    %s9 = scalar_lea.sflag [#allocation3], 1
    %10 = vsyncpa %s9, 0
    %11 = vsyncpa [#allocation5], 0
    loop: start=0, step=1, limit=4
    $region2: #{_generator_pallas.1} parent=1 // loop_pre_header
      _
    $region3: #{_generator_pallas.1} parent=1 // loop_header
      %s13 = sphi 0, %s17
      %p14 = scmp.ge.s32.totalorder %s13, 4
      %s23 = sphi 0, %s25
      %s26 = sphi 0, %s23
      %s27 = sphi 0, %s26
      %s43 = sphi 0, %s27
      %s47 = sphi 0, %s47
      %s49 = sphi 0, %s47
      %s50 = sphi 0, %s49
      %s64 = sphi 0, %s50
      %s68 = sphi 0, %s68
      %s70 = sphi 0, %s68
      %s71 = sphi 0, %s70
      %s85 = sphi 0, %s71
      %s91 = sphi 0, %s93
      %s94 = sphi 0, %s91
      %s95 = sphi 0, %s94
      %s111 = sphi 0, %s95
    $region4: #{_generator_pallas.1} parent=1 // loop_header_branch
      %16 = sbr.rel (%p14) target = $region8
    $region5: #{_generator_pallas.1} parent=1 // loop_body
      %s18 = ssub.s32 %s13, 1
      %s19 = ssub.s32 %s13, 2
      %s20 = sadd.s32 %s13, 1
      %s21 = ssub.s32 %s13, %s20
      %p22 = scmp.eq.s32.totalorder %s21, 0
      %s24 = sadd.s32 %s23, 1
      %s25 = scalar_select %p22, %s23, %s24
      %p28 = pneg %p22
      %p29 = scmp.eq.s32.totalorder %s13, 1
      %p30 = por %p28, %p29
      %p31 = scmp.ne.s32.totalorder %s23, %s26
      %p32 = scmp.eq.s32.totalorder %s13, 0
      %p33 = por %p31, %p32
      %p34 = scmp.ne.s32.totalorder %s23, %s26
      %p35 = scmp.eq.s32.totalorder %s18, 1
      %p36 = por %p34, %p35
      %p37 = scmp.ne.s32.totalorder %s26, %s27
      %p38 = scmp.eq.s32.totalorder %s18, 0
      %p39 = por %p37, %p38
      %p40 = scmp.ne.s32.totalorder %s26, %s27
      %p41 = scmp.eq.s32.totalorder %s19, 1
      %p42 = por %p40, %p41
      %p44 = scmp.ne.s32.totalorder %s27, %s43
      %p45 = scmp.eq.s32.totalorder %s19, 0
      %p46 = por %p44, %p45
      %s48 = sadd.s32 %s47, 1
      %p51 = scmp.eq.s32.totalorder %s13, 1
      %p52 = scmp.ne.s32.totalorder %s47, %s49
      %p53 = scmp.eq.s32.totalorder %s13, 0
      %p54 = por %p52, %p53
      %p55 = scmp.ne.s32.totalorder %s47, %s49
      %p56 = scmp.eq.s32.totalorder %s18, 1
      %p57 = por %p55, %p56
      %p58 = scmp.ne.s32.totalorder %s49, %s50
      %p59 = scmp.eq.s32.totalorder %s18, 0
      %p60 = por %p58, %p59
      %p61 = scmp.ne.s32.totalorder %s49, %s50
      %p62 = scmp.eq.s32.totalorder %s19, 1
      %p63 = por %p61, %p62
      %p65 = scmp.ne.s32.totalorder %s50, %s64
      %p66 = scmp.eq.s32.totalorder %s19, 0
      %p67 = por %p65, %p66
      %s69 = sadd.s32 %s68, 1
      %p72 = scmp.eq.s32.totalorder %s13, 1
      %p73 = scmp.ne.s32.totalorder %s68, %s70
      %p74 = scmp.eq.s32.totalorder %s13, 0
      %p75 = por %p73, %p74
      %p76 = scmp.ne.s32.totalorder %s68, %s70
      %p77 = scmp.eq.s32.totalorder %s18, 1
      %p78 = por %p76, %p77
      %p79 = scmp.ne.s32.totalorder %s70, %s71
      %p80 = scmp.eq.s32.totalorder %s18, 0
      %p81 = por %p79, %p80
      %p82 = scmp.ne.s32.totalorder %s70, %s71
      %p83 = scmp.eq.s32.totalorder %s19, 1
      %p84 = por %p82, %p83
      %p86 = scmp.ne.s32.totalorder %s71, %s85
      %p87 = scmp.eq.s32.totalorder %s19, 0
      %p88 = por %p86, %p87
      %s89 = ssub.s32 %s13, %s20
      %p90 = scmp.eq.s32.totalorder %s89, 0
      %s92 = sadd.s32 %s91, 1
      %s93 = scalar_select %p90, %s91, %s92
      %p96 = pneg %p90
      %p97 = scmp.eq.s32.totalorder %s13, 1
      %p98 = por %p96, %p97
      %p99 = scmp.ne.s32.totalorder %s91, %s94
      %p100 = scmp.eq.s32.totalorder %s13, 0
      %p101 = por %p99, %p100
      %p102 = scmp.ne.s32.totalorder %s91, %s94
      %p103 = scmp.eq.s32.totalorder %s18, 1
      %p104 = por %p102, %p103
      %p105 = scmp.ne.s32.totalorder %s94, %s95
      %p106 = scmp.eq.s32.totalorder %s18, 0
      %p107 = por %p105, %p106
      %p108 = scmp.ne.s32.totalorder %s94, %s95
      %p109 = scmp.eq.s32.totalorder %s19, 1
      %p110 = por %p108, %p109
      %p112 = scmp.ne.s32.totalorder %s95, %s111
      %p113 = scmp.eq.s32.totalorder %s19, 0
      %p114 = por %p112, %p113
      %p115 = scmp.le.s32.totalorder 1, %s13
      %p116 = scmp.lt.s32.totalorder %s13, 3
      %p117 = pnand %p115, %p116
      %p118 = pneg %p117
      // Predicated region
      $region9: #{_generator_pallas.1} parent=5 // pred_check
        _
      $region10: #{_generator_pallas.1} parent=5 // pred_check_branch
        %120 = sbr.rel (%p117) target = $region12
      $region11: #{_generator_pallas.1} parent=5 // pred_region
        %s121 = ssub.s32 %s13, 1
        // Predicated region
        $region13: #{_generator_pallas.1} parent=11 // pred_check
          %p122 = pneg %p60
        $region14: #{_generator_pallas.1} parent=11 // pred_check_branch
          %124 = sbr.rel (%p122) target = $region16
        $region15: #{_generator_pallas.1} parent=11 // pred_region
          %s126 = ssub.s32 11648, 11648
          %127 = vsyncadd [#allocation5], %s126
          %s128 = sshll.u32 [#allocation4], 4
          %s129 = int_to_ptr.vmem [resolvable:$true] %s128
          %134 = dma.hbm_to_vmem [thread:$0]  %s1, 11648, %s129, [#allocation5], 896, 896, 56
        $region16: #{_generator_pallas.1} parent=11 // pred_fallthru
          _
        // Predicated region
        $region17: #{_generator_pallas.1} parent=11 // pred_check
          %p135 = pneg %p81
        $region18: #{_generator_pallas.1} parent=11 // pred_check_branch
          %137 = sbr.rel (%p135) target = $region20
        $region19: #{_generator_pallas.1} parent=11 // pred_region
          %s139 = ssub.s32 112, 112
          %140 = vsyncadd [#allocation5], %s139
          %s142 = sshll.u32 [#allocation6], 4
          %s143 = int_to_ptr.vmem [resolvable:$true] %s142
          %145 = dma.hbm_to_vmem [thread:$0]  %s2, 112, %s143, [#allocation5]
        $region20: #{_generator_pallas.1} parent=11 // pred_fallthru
          _
      $region12: #{_generator_pallas.1} parent=5 // pred_fallthru
        _
      %p146 = scmp.lt.s32.totalorder %s13, 2
      // Predicated region
      $region21: #{_generator_pallas.1} parent=5 // pred_check
        %p147 = pneg %p146
      $region22: #{_generator_pallas.1} parent=5 // pred_check_branch
        %149 = sbr.rel (%p147) target = $region24
      $region23: #{_generator_pallas.1} parent=5 // pred_region
        // Predicated region
        $region25: #{_generator_pallas.1} parent=23 // pred_check
          %p150 = pneg %p33
        $region26: #{_generator_pallas.1} parent=23 // pred_check_branch
          %152 = sbr.rel (%p150) target = $region28
        $region27: #{_generator_pallas.1} parent=23 // pred_region
          %s153 = sand.u32 %s23, 1
          %s154 = scalar_lea.sflag [#allocation3], %s153
          %s155 = sand.u32 %s23, 1
          %s156 = smul.addr %s155, 8
          %s157 = scalar_lea.vmem [#allocation2], %s156
          %s159 = ssub.s32 128, 128
          %160 = vsyncadd %s154, %s159
          %s161 = smul.addr %s13, 128
          %s162 = scalar_lea.hbm %s0, %s161
          %s164 = sshll.u32 %s157, 4
          %s165 = int_to_ptr.vmem [resolvable:$true] %s164
          %167 = dma.hbm_to_vmem [thread:$0]  %s162, 128, %s165, %s154
        $region28: #{_generator_pallas.1} parent=23 // pred_fallthru
          _
      $region24: #{_generator_pallas.1} parent=5 // pred_fallthru
        _
      %p168 = scmp.le.s32.totalorder 1, %s13
      %p169 = scmp.lt.s32.totalorder %s13, 3
      %p170 = pnand %p168, %p169
      %p171 = pneg %p170
      // Predicated region
      $region29: #{_generator_pallas.1} parent=5 // pred_check
        _
      $region30: #{_generator_pallas.1} parent=5 // pred_check_branch
        %173 = sbr.rel (%p170) target = $region32
      $region31: #{_generator_pallas.1} parent=5 // pred_region
        %s174 = ssub.s32 %s13, 1
        %s175 = sand.u32 %s26, 1
        %s176 = scalar_lea.sflag [#allocation3], %s175
        %s177 = sand.u32 %s26, 1
        %s178 = smul.addr %s177, 8
        %s179 = scalar_lea.vmem [#allocation2], %s178
        // Predicated region
        $region33: #{_generator_pallas.1} parent=31 // pred_check
          %p180 = pneg %p39
        $region34: #{_generator_pallas.1} parent=31 // pred_check_branch
          %182 = sbr.rel (%p180) target = $region36
        $region35: #{_generator_pallas.1} parent=31 // pred_region
          %183 = dma.done %s176, 128
        $region36: #{_generator_pallas.1} parent=31 // pred_fallthru
          _
        // Predicated region
        $region37: #{_generator_pallas.1} parent=31 // pred_check
          %p184 = pneg %p60
        $region38: #{_generator_pallas.1} parent=31 // pred_check_branch
          %186 = sbr.rel (%p184) target = $region40
        $region39: #{_generator_pallas.1} parent=31 // pred_region
          %187 = dma.done [#allocation5], 11648
        $region40: #{_generator_pallas.1} parent=31 // pred_fallthru
          _
        // Predicated region
        $region41: #{_generator_pallas.1} parent=31 // pred_check
          %p188 = pneg %p81
        $region42: #{_generator_pallas.1} parent=31 // pred_check_branch
          %190 = sbr.rel (%p188) target = $region44
        $region43: #{_generator_pallas.1} parent=31 // pred_region
          %191 = dma.done [#allocation5], 112
        $region44: #{_generator_pallas.1} parent=31 // pred_fallthru
          _
        %s192 = sand.u32 %s26, 1
        %s193 = scalar_lea.sflag [#allocation3], %s192
        %s194 = sand.u32 %s26, 1
        %s195 = smul.addr %s194, 8
        %s196 = scalar_lea.vmem [#allocation2], %s195
        %p197 = pneg %p39
        %p198 = pneg %p36
        %p199 = pneg %p60
        %p200 = pneg %p57
        %p201 = pneg %p81
        %p202 = pneg %p78
        %p203 = pneg %p107
        %p204 = pneg %p104
        %p205 = scmp.lt.s32.totalorder %s18, 1
        %s206 = scalar_select %p205, %s18, 1
        %s207 = smul.addr %s206, 7
        %s208 = smul.addr %s207, 8
        %s209 = scalar_lea.vmem %s3, %s208
        %p210 = scmp.lt.s32.totalorder %s18, 1
        %s211 = scalar_select %p210, %s18, 1
        %s212 = smul.addr %s211, 7
        %s213 = smul.addr %s212, 8
        %s214 = scalar_lea.vmem %s3, %s213
        %v215 = vld [vmem:[%s179] sm:$0xff]
        %v216 = vld [vmem:[#allocation4] sm:$0xff]
        %v217 = vld [vmem:[#allocation4 + $0x8] sm:$0xff]
        %v218 = vld [vmem:[#allocation4 + $0x10] sm:$0xff]
        %v219 = vld [vmem:[#allocation4 + $0x18] sm:$0xff]
        %v220 = vld [vmem:[#allocation4 + $0x20] sm:$0xff]
        %v221 = vld [vmem:[#allocation4 + $0x28] sm:$0xff]
        %v222 = vld [vmem:[#allocation4 + $0x30] sm:$0xff]
        %v223 = vld [vmem:[#allocation4 + $0x38] sm:$0xff]
        %v224 = vld [vmem:[#allocation4 + $0x40] sm:$0xff]
        %v225 = vld [vmem:[#allocation4 + $0x48] sm:$0xff]
        %v226 = vld [vmem:[#allocation4 + $0x50] sm:$0xff]
        %v227 = vld [vmem:[#allocation4 + $0x58] sm:$0xff]
        %v228 = vld [vmem:[#allocation4 + $0x60] sm:$0xff]
        %v229 = vld [vmem:[#allocation4 + $0x68] sm:$0xff]
        %v230 = vld [vmem:[#allocation4 + $0x70] sm:$0xff]
        %v231 = vld [vmem:[#allocation4 + $0x78] sm:$0xff]
        %v232 = vld [vmem:[#allocation4 + $0x80] sm:$0xff]
        %v233 = vld [vmem:[#allocation4 + $0x88] sm:$0xff]
        %v234 = vld [vmem:[#allocation4 + $0x90] sm:$0xff]
        %v235 = vld [vmem:[#allocation4 + $0x98] sm:$0xff]
        %v236 = vld [vmem:[#allocation4 + $0xa0] sm:$0xff]
        %v237 = vld [vmem:[#allocation4 + $0xa8] sm:$0xff]
        %v238 = vld [vmem:[#allocation4 + $0xb0] sm:$0xff]
        %v239 = vld [vmem:[#allocation4 + $0xb8] sm:$0xff]
        %v240 = vld [vmem:[#allocation4 + $0xc0] sm:$0xff]
        %v241 = vld [vmem:[#allocation4 + $0xc8] sm:$0xff]
        %v242 = vld [vmem:[#allocation4 + $0xd0] sm:$0xff]
        %v243 = vld [vmem:[#allocation4 + $0xd8] sm:$0xff]
        %v244 = vld [vmem:[#allocation4 + $0xe0] sm:$0xff]
        %v245 = vld [vmem:[#allocation4 + $0xe8] sm:$0xff]
        %v246 = vld [vmem:[#allocation4 + $0xf0] sm:$0xff]
        %v247 = vld [vmem:[#allocation4 + $0xf8] sm:$0xff]
        %v248 = vld [vmem:[#allocation4 + $0x100] sm:$0xff]
        %v249 = vld [vmem:[#allocation4 + $0x108] sm:$0xff]
        %v250 = vld [vmem:[#allocation4 + $0x110] sm:$0xff]
        %v251 = vld [vmem:[#allocation4 + $0x118] sm:$0xff]
        %v252 = vld [vmem:[#allocation4 + $0x120] sm:$0xff]
        %v253 = vld [vmem:[#allocation4 + $0x128] sm:$0xff]
        %v254 = vld [vmem:[#allocation4 + $0x130] sm:$0xff]
        %v255 = vld [vmem:[#allocation4 + $0x138] sm:$0xff]
        %v256 = vld [vmem:[#allocation4 + $0x140] sm:$0xff]
        %v257 = vld [vmem:[#allocation4 + $0x148] sm:$0xff]
        %v258 = vld [vmem:[#allocation4 + $0x150] sm:$0xff]
        %v259 = vld [vmem:[#allocation4 + $0x158] sm:$0xff]
        %v260 = vld [vmem:[#allocation4 + $0x160] sm:$0xff]
        %v261 = vld [vmem:[#allocation4 + $0x168] sm:$0xff]
        %v262 = vld [vmem:[#allocation4 + $0x170] sm:$0xff]
        %v263 = vld [vmem:[#allocation4 + $0x178] sm:$0xff]
        %v264 = vld [vmem:[#allocation4 + $0x180] sm:$0xff]
        %v265 = vld [vmem:[#allocation4 + $0x188] sm:$0xff]
        %v266 = vld [vmem:[#allocation4 + $0x190] sm:$0xff]
        %v267 = vld [vmem:[#allocation4 + $0x198] sm:$0xff]
        %v268 = vld [vmem:[#allocation4 + $0x1a0] sm:$0xff]
        %v269 = vld [vmem:[#allocation4 + $0x1a8] sm:$0xff]
        %v270 = vld [vmem:[#allocation4 + $0x1b0] sm:$0xff]
        %v271 = vld [vmem:[#allocation4 + $0x1b8] sm:$0xff]
        %v272 = vld [vmem:[#allocation4 + $0x1c0] sm:$0xff]
        %v273 = vld [vmem:[#allocation4 + $0x1c8] sm:$0xff]
        %v274 = vld [vmem:[#allocation4 + $0x1d0] sm:$0xff]
        %v275 = vld [vmem:[#allocation4 + $0x1d8] sm:$0xff]
        %v276 = vld [vmem:[#allocation4 + $0x1e0] sm:$0xff]
        %v277 = vld [vmem:[#allocation4 + $0x1e8] sm:$0xff]
        %v278 = vld [vmem:[#allocation4 + $0x1f0] sm:$0xff]
        %v279 = vld [vmem:[#allocation4 + $0x1f8] sm:$0xff]
        %v280 = vld [vmem:[#allocation4 + $0x200] sm:$0xff]
        %v281 = vld [vmem:[#allocation4 + $0x208] sm:$0xff]
        %v282 = vld [vmem:[#allocation4 + $0x210] sm:$0xff]
        %v283 = vld [vmem:[#allocation4 + $0x218] sm:$0xff]
        %v284 = vld [vmem:[#allocation4 + $0x220] sm:$0xff]
        %v285 = vld [vmem:[#allocation4 + $0x228] sm:$0xff]
        %v286 = vld [vmem:[#allocation4 + $0x230] sm:$0xff]
        %v287 = vld [vmem:[#allocation4 + $0x238] sm:$0xff]
        %v288 = vld [vmem:[#allocation4 + $0x240] sm:$0xff]
        %v289 = vld [vmem:[#allocation4 + $0x248] sm:$0xff]
        %v290 = vld [vmem:[#allocation4 + $0x250] sm:$0xff]
        %v291 = vld [vmem:[#allocation4 + $0x258] sm:$0xff]
        %v292 = vld [vmem:[#allocation4 + $0x260] sm:$0xff]
        %v293 = vld [vmem:[#allocation4 + $0x268] sm:$0xff]
        %v294 = vld [vmem:[#allocation4 + $0x270] sm:$0xff]
        %v295 = vld [vmem:[#allocation4 + $0x278] sm:$0xff]
        %v296 = vld [vmem:[#allocation4 + $0x280] sm:$0xff]
        %v297 = vld [vmem:[#allocation4 + $0x288] sm:$0xff]
        %v298 = vld [vmem:[#allocation4 + $0x290] sm:$0xff]
        %v299 = vld [vmem:[#allocation4 + $0x298] sm:$0xff]
        %v300 = vld [vmem:[#allocation4 + $0x2a0] sm:$0xf]
        %v301 = vld [vmem:[#allocation4 + $0x2a8] sm:$0xf]
        %v302 = vld [vmem:[#allocation4 + $0x2b0] sm:$0xf]
        %v303 = vld [vmem:[#allocation4 + $0x2b8] sm:$0xf]
        %v304 = vld [vmem:[#allocation4 + $0x2c0] sm:$0xf]
        %v305 = vld [vmem:[#allocation4 + $0x2c8] sm:$0xf]
        %v306 = vld [vmem:[#allocation4 + $0x2d0] sm:$0xf]
        %vm307 = vcmask 818176
        %v309 = vsel %vm307, %v215, 0
        %vm311 = vcmask 1043456
        %v313 = vsel %vm311, %v300, 0
        %v316 = vsel %vm311, %v301, 0
        %v319 = vsel %vm311, %v302, 0
        %v322 = vsel %vm311, %v303, 0
        %v325 = vsel %vm311, %v304, 0
        %v328 = vsel %vm311, %v305, 0
        %v331 = vsel %vm311, %v306, 0
        %333 = vmatprep.subr.mxu0 0.0
        %334 = vmatpush1.msra.mxu0 0.0
        %335 = vmatprep.subr.mxu0 0.0
        %336 = vmatpush1.msra.mxu0 0.0
        %337 = vmatprep.subr.mxu0 0.0
        %338 = vmatpush1.msra.mxu0 0.0
        %339 = vmatprep.subr.mxu0 %v316
        %340 = vmatpush1.msra.mxu0 %v313
        %341 = vmatprep.subr.mxu0 %v294
        %342 = vmatpush1.msra.mxu0 %v293
        %343 = vmatprep.subr.mxu0 %v287
        %344 = vmatpush1.msra.mxu0 %v286
        %345 = vmatprep.subr.mxu0 %v280
        %346 = vmatpush1.msra.mxu0 %v279
        %347 = vmatprep.subr.mxu0 %v273
        %348 = vmatpush1.msra.mxu0 %v272
        %349 = vmatprep.subr.mxu0 %v266
        %350 = vmatpush1.msra.mxu0 %v265
        %351 = vmatprep.subr.mxu0 %v259
        %352 = vmatpush1.msra.mxu0 %v258
        %353 = vmatprep.subr.mxu0 %v252
        %354 = vmatpush1.msra.mxu0 %v251
        %355 = vmatprep.subr.mxu0 %v245
        %356 = vmatpush1.msra.mxu0 %v244
        %357 = vmatprep.subr.mxu0 %v238
        %358 = vmatpush1.msra.mxu0 %v237
        %359 = vmatprep.subr.mxu0 %v231
        %360 = vmatpush1.msra.mxu0 %v230
        %361 = vmatprep.subr.mxu0 %v224
        %362 = vmatpush1.msra.mxu0 %v223
        %363 = vmatprep.subr.mxu0 %v217
        %364 = vmatpush1.msra.mxu0 %v216
        %365 = vmatprep.subr.mxu0 0.0
        %366 = vmatpush2.msra.mxu0 0.0
        %367 = vmatprep.subr.mxu0 0.0
        %368 = vmatpush2.msra.mxu0 0.0
        %369 = vmatprep.subr.mxu0 0.0
        %370 = vmatpush2.msra.mxu0 0.0
        %371 = vmatprep.subr.mxu0 0.0
        %372 = vmatpush2.msra.mxu0 0.0
        %373 = vmatprep.subr.mxu0 0.0
        %374 = vmatpush2.msra.mxu0 0.0
        %375 = vmatprep.subr.mxu0 0.0
        %376 = vmatpush2.msra.mxu0 0.0
        %377 = vmatprep.subr.mxu0 0.0
        %378 = vmatpush2.msra.mxu0 0.0
        %379 = vmatprep.subr.mxu0 0.0
        %380 = vmatpush2.msra.mxu0 0.0
        %381 = vmatprep.subr.mxu0 0.0
        %382 = vmatpush2.msra.mxu0 0.0
        %383 = vmatprep.subr.mxu0 0.0
        %384 = vmatpush2.msra.mxu0 0.0
        %385 = vmatprep.subr.mxu0 0.0
        %386 = vmatpush2.msra.mxu0 0.0
        %387 = vmatprep.subr.mxu0 0.0
        %388 = vmatpush2.msra.mxu0 0.0
        %389 = vmatprep.subr.mxu0 0.0
        %390 = vmatpush2.msra.mxu0 0.0
        %391 = vmatprep.subr.mxu0 0.0
        %392 = vmatpush2.msra.mxu0 0.0
        %393 = vmatprep.subr.mxu0 0.0
        %394 = vmatpush2.msra.mxu0 0.0
        %395 = vmatprep.subr.mxu0 0.0
        %396 = vmatpush2.msra.mxu0 0.0
        %397 = vmatprep.mubr.f32.mxu0 0.0
        %398 = vmatmul.mubr.f32.gmra.mxu0 %v309
        %v399 = vpop.f32.mrf.mxu0
        %v400 = vadd.f32 0.0, %v399
        %v401 = vpop.f32.mrf.mxu0
        %v402 = vadd.f32 0.0, %v401
        %403 = vdwg.mxu0
        %404 = vmatprep.subr.mxu0 0.0
        %405 = vmatpush1.msra.mxu0 0.0
        %406 = vmatprep.subr.mxu0 0.0
        %407 = vmatpush1.msra.mxu0 0.0
        %408 = vmatprep.subr.mxu0 0.0
        %409 = vmatpush1.msra.mxu0 0.0
        %410 = vmatprep.subr.mxu0 %v322
        %411 = vmatpush1.msra.mxu0 %v319
        %412 = vmatprep.subr.mxu0 %v296
        %413 = vmatpush1.msra.mxu0 %v295
        %414 = vmatprep.subr.mxu0 %v289
        %415 = vmatpush1.msra.mxu0 %v288
        %416 = vmatprep.subr.mxu0 %v282
        %417 = vmatpush1.msra.mxu0 %v281
        %418 = vmatprep.subr.mxu0 %v275
        %419 = vmatpush1.msra.mxu0 %v274
        %420 = vmatprep.subr.mxu0 %v268
        %421 = vmatpush1.msra.mxu0 %v267
        %422 = vmatprep.subr.mxu0 %v261
        %423 = vmatpush1.msra.mxu0 %v260
        %424 = vmatprep.subr.mxu0 %v254
        %425 = vmatpush1.msra.mxu0 %v253
        %426 = vmatprep.subr.mxu0 %v247
        %427 = vmatpush1.msra.mxu0 %v246
        %428 = vmatprep.subr.mxu0 %v240
        %429 = vmatpush1.msra.mxu0 %v239
        %430 = vmatprep.subr.mxu0 %v233
        %431 = vmatpush1.msra.mxu0 %v232
        %432 = vmatprep.subr.mxu0 %v226
        %433 = vmatpush1.msra.mxu0 %v225
        %434 = vmatprep.subr.mxu0 %v219
        %435 = vmatpush1.msra.mxu0 %v218
        %436 = vmatprep.subr.mxu0 0.0
        %437 = vmatpush2.msra.mxu0 0.0
        %438 = vmatprep.subr.mxu0 0.0
        %439 = vmatpush2.msra.mxu0 0.0
        %440 = vmatprep.subr.mxu0 0.0
        %441 = vmatpush2.msra.mxu0 0.0
        %442 = vmatprep.subr.mxu0 0.0
        %443 = vmatpush2.msra.mxu0 0.0
        %444 = vmatprep.subr.mxu0 0.0
        %445 = vmatpush2.msra.mxu0 0.0
        %446 = vmatprep.subr.mxu0 0.0
        %447 = vmatpush2.msra.mxu0 0.0
        %448 = vmatprep.subr.mxu0 0.0
        %449 = vmatpush2.msra.mxu0 0.0
        %450 = vmatprep.subr.mxu0 0.0
        %451 = vmatpush2.msra.mxu0 0.0
        %452 = vmatprep.subr.mxu0 0.0
        %453 = vmatpush2.msra.mxu0 0.0
        %454 = vmatprep.subr.mxu0 0.0
        %455 = vmatpush2.msra.mxu0 0.0
        %456 = vmatprep.subr.mxu0 0.0
        %457 = vmatpush2.msra.mxu0 0.0
        %458 = vmatprep.subr.mxu0 0.0
        %459 = vmatpush2.msra.mxu0 0.0
        %460 = vmatprep.subr.mxu0 0.0
        %461 = vmatpush2.msra.mxu0 0.0
        %462 = vmatprep.subr.mxu0 0.0
        %463 = vmatpush2.msra.mxu0 0.0
        %464 = vmatprep.subr.mxu0 0.0
        %465 = vmatpush2.msra.mxu0 0.0
        %466 = vmatprep.subr.mxu0 0.0
        %467 = vmatpush2.msra.mxu0 0.0
        %468 = vmatprep.mubr.f32.mxu0 0.0
        %469 = vmatmul.mubr.f32.gmra.mxu0 %v309
        %v470 = vpop.f32.mrf.mxu0
        %v471 = vadd.f32 0.0, %v470
        %v472 = vpop.f32.mrf.mxu0
        %v473 = vadd.f32 0.0, %v472
        %474 = vdwg.mxu0
        %475 = vmatprep.subr.mxu0 0.0
        %476 = vmatpush1.msra.mxu0 0.0
        %477 = vmatprep.subr.mxu0 0.0
        %478 = vmatpush1.msra.mxu0 0.0
        %479 = vmatprep.subr.mxu0 0.0
        %480 = vmatpush1.msra.mxu0 0.0
        %481 = vmatprep.subr.mxu0 %v328
        %482 = vmatpush1.msra.mxu0 %v325
        %483 = vmatprep.subr.mxu0 %v298
        %484 = vmatpush1.msra.mxu0 %v297
        %485 = vmatprep.subr.mxu0 %v291
        %486 = vmatpush1.msra.mxu0 %v290
        %487 = vmatprep.subr.mxu0 %v284
        %488 = vmatpush1.msra.mxu0 %v283
        %489 = vmatprep.subr.mxu0 %v277
        %490 = vmatpush1.msra.mxu0 %v276
        %491 = vmatprep.subr.mxu0 %v270
        %492 = vmatpush1.msra.mxu0 %v269
        %493 = vmatprep.subr.mxu0 %v263
        %494 = vmatpush1.msra.mxu0 %v262
        %495 = vmatprep.subr.mxu0 %v256
        %496 = vmatpush1.msra.mxu0 %v255
        %497 = vmatprep.subr.mxu0 %v249
        %498 = vmatpush1.msra.mxu0 %v248
        %499 = vmatprep.subr.mxu0 %v242
        %500 = vmatpush1.msra.mxu0 %v241
        %501 = vmatprep.subr.mxu0 %v235
        %502 = vmatpush1.msra.mxu0 %v234
        %503 = vmatprep.subr.mxu0 %v228
        %504 = vmatpush1.msra.mxu0 %v227
        %505 = vmatprep.subr.mxu0 %v221
        %506 = vmatpush1.msra.mxu0 %v220
        %507 = vmatprep.subr.mxu0 0.0
        %508 = vmatpush2.msra.mxu0 0.0
        %509 = vmatprep.subr.mxu0 0.0
        %510 = vmatpush2.msra.mxu0 0.0
        %511 = vmatprep.subr.mxu0 0.0
        %512 = vmatpush2.msra.mxu0 0.0
        %513 = vmatprep.subr.mxu0 0.0
        %514 = vmatpush2.msra.mxu0 0.0
        %515 = vmatprep.subr.mxu0 0.0
        %516 = vmatpush2.msra.mxu0 0.0
        %517 = vmatprep.subr.mxu0 0.0
        %518 = vmatpush2.msra.mxu0 0.0
        %519 = vmatprep.subr.mxu0 0.0
        %520 = vmatpush2.msra.mxu0 0.0
        %521 = vmatprep.subr.mxu0 0.0
        %522 = vmatpush2.msra.mxu0 0.0
        %523 = vmatprep.subr.mxu0 0.0
        %524 = vmatpush2.msra.mxu0 0.0
        %525 = vmatprep.subr.mxu0 0.0
        %526 = vmatpush2.msra.mxu0 0.0
        %527 = vmatprep.subr.mxu0 0.0
        %528 = vmatpush2.msra.mxu0 0.0
        %529 = vmatprep.subr.mxu0 0.0
        %530 = vmatpush2.msra.mxu0 0.0
        %531 = vmatprep.subr.mxu0 0.0
        %532 = vmatpush2.msra.mxu0 0.0
        %533 = vmatprep.subr.mxu0 0.0
        %534 = vmatpush2.msra.mxu0 0.0
        %535 = vmatprep.subr.mxu0 0.0
        %536 = vmatpush2.msra.mxu0 0.0
        %537 = vmatprep.subr.mxu0 0.0
        %538 = vmatpush2.msra.mxu0 0.0
        %539 = vmatprep.mubr.f32.mxu0 0.0
        %540 = vmatmul.mubr.f32.gmra.mxu0 %v309
        %v541 = vpop.f32.mrf.mxu0
        %v542 = vadd.f32 0.0, %v541
        %v543 = vpop.f32.mrf.mxu0
        %v544 = vadd.f32 0.0, %v543
        %545 = vdwg.mxu0
        %546 = vmatprep.subr.mxu0 0.0
        %547 = vmatpush1.msra.mxu0 0.0
        %548 = vmatprep.subr.mxu0 0.0
        %549 = vmatpush1.msra.mxu0 0.0
        %550 = vmatprep.subr.mxu0 0.0
        %551 = vmatpush1.msra.mxu0 0.0
        %552 = vmatprep.subr.mxu0 0.0
        %553 = vmatpush1.msra.mxu0 %v331
        %554 = vmatprep.subr.mxu0 0.0
        %555 = vmatpush1.msra.mxu0 %v299
        %556 = vmatprep.subr.mxu0 0.0
        %557 = vmatpush1.msra.mxu0 %v292
        %558 = vmatprep.subr.mxu0 0.0
        %559 = vmatpush1.msra.mxu0 %v285
        %560 = vmatprep.subr.mxu0 0.0
        %561 = vmatpush1.msra.mxu0 %v278
        %562 = vmatprep.subr.mxu0 0.0
        %563 = vmatpush1.msra.mxu0 %v271
        %564 = vmatprep.subr.mxu0 0.0
        %565 = vmatpush1.msra.mxu0 %v264
        %566 = vmatprep.subr.mxu0 0.0
        %567 = vmatpush1.msra.mxu0 %v257
        %568 = vmatprep.subr.mxu0 0.0
        %569 = vmatpush1.msra.mxu0 %v250
        %570 = vmatprep.subr.mxu0 0.0
        %571 = vmatpush1.msra.mxu0 %v243
        %572 = vmatprep.subr.mxu0 0.0
        %573 = vmatpush1.msra.mxu0 %v236
        %574 = vmatprep.subr.mxu0 0.0
        %575 = vmatpush1.msra.mxu0 %v229
        %576 = vmatprep.subr.mxu0 0.0
        %577 = vmatpush1.msra.mxu0 %v222
        %578 = vmatprep.subr.mxu0 0.0
        %579 = vmatpush2.msra.mxu0 0.0
        %580 = vmatprep.subr.mxu0 0.0
        %581 = vmatpush2.msra.mxu0 0.0
        %582 = vmatprep.subr.mxu0 0.0
        %583 = vmatpush2.msra.mxu0 0.0
        %584 = vmatprep.subr.mxu0 0.0
        %585 = vmatpush2.msra.mxu0 0.0
        %586 = vmatprep.subr.mxu0 0.0
        %587 = vmatpush2.msra.mxu0 0.0
        %588 = vmatprep.subr.mxu0 0.0
        %589 = vmatpush2.msra.mxu0 0.0
        %590 = vmatprep.subr.mxu0 0.0
        %591 = vmatpush2.msra.mxu0 0.0
        %592 = vmatprep.subr.mxu0 0.0
        %593 = vmatpush2.msra.mxu0 0.0
        %594 = vmatprep.subr.mxu0 0.0
        %595 = vmatpush2.msra.mxu0 0.0
        %596 = vmatprep.subr.mxu0 0.0
        %597 = vmatpush2.msra.mxu0 0.0
        %598 = vmatprep.subr.mxu0 0.0
        %599 = vmatpush2.msra.mxu0 0.0
        %600 = vmatprep.subr.mxu0 0.0
        %601 = vmatpush2.msra.mxu0 0.0
        %602 = vmatprep.subr.mxu0 0.0
        %603 = vmatpush2.msra.mxu0 0.0
        %604 = vmatprep.subr.mxu0 0.0
        %605 = vmatpush2.msra.mxu0 0.0
        %606 = vmatprep.subr.mxu0 0.0
        %607 = vmatpush2.msra.mxu0 0.0
        %608 = vmatprep.subr.mxu0 0.0
        %609 = vmatpush2.msra.mxu0 0.0
        %610 = vmatprep.mubr.f32.mxu0 0.0
        %611 = vmatmul.mubr.f32.gmra.mxu0 %v309
        %v612 = vpop.f32.mrf.mxu0
        %v613 = vadd.f32 0.0, %v612
        %v614 = vpop.f32.mrf.mxu0
        %615 = vdwg.mxu0
        %v616 = vld [vmem:[#allocation6] sm:$0x7f]
        %v618 = vlaneseq
        %v619 = vshrl.u32 %v618, 7
        %v620 = vsub.s32 0, %v619
        %v621 = vrot.slane %v616, %v620
        %v622 = vlaneseq
        %v623 = vshrl.u32 %v622, 7
        %v624 = vsub.s32 1, %v623
        %v625 = vrot.slane %v616, %v624
        %v626 = vlaneseq
        %v627 = vshrl.u32 %v626, 7
        %v628 = vsub.s32 2, %v627
        %v629 = vrot.slane %v616, %v628
        %v630 = vlaneseq
        %v631 = vshrl.u32 %v630, 7
        %v632 = vsub.s32 3, %v631
        %v633 = vrot.slane %v616, %v632
        %v634 = vlaneseq
        %v635 = vshrl.u32 %v634, 7
        %v636 = vsub.s32 4, %v635
        %v637 = vrot.slane %v616, %v636
        %v638 = vlaneseq
        %v639 = vshrl.u32 %v638, 7
        %v640 = vsub.s32 5, %v639
        %v641 = vrot.slane %v616, %v640
        %v642 = vlaneseq
        %v643 = vshrl.u32 %v642, 7
        %v644 = vsub.s32 6, %v643
        %v645 = vrot.slane %v616, %v644
        %v653 = vadd.f32 %v400, %v621
        %v654 = vadd.f32 %v402, %v625
        %v655 = vadd.f32 %v471, %v629
        %v656 = vadd.f32 %v473, %v633
        %v657 = vadd.f32 %v542, %v637
        %v658 = vadd.f32 %v544, %v641
        %v659 = vadd.f32 %v613, %v645
        %v660 = vtanh.pop %v653
        %v661 = vtanh.pop %v654
        %v662 = vtanh.pop %v655
        %v663 = vtanh.pop %v656
        %v664 = vtanh.pop %v657
        %v665 = vtanh.pop %v658
        %v666 = vtanh.pop %v659
        %667 = vst [vmem:[%s214] sm:$0xff] %v660
        %668 = vst [vmem:[%s214 + $0x8] sm:$0xff] %v661
        %669 = vst [vmem:[%s214 + $0x10] sm:$0xff] %v662
        %670 = vst [vmem:[%s214 + $0x18] sm:$0xff] %v663
        %671 = vst [vmem:[%s214 + $0x20] sm:$0xff] %v664
        %672 = vst [vmem:[%s214 + $0x28] sm:$0xff] %v665
        %vm673 = vcmask 130048
        %674 = vst.msk [vmem:[%s214 + $0x30] sm:$0xff] %vm673, %v666
        %p675 = scmp.lt.s32.totalorder %s18, 1
        %s676 = scalar_select %p675, %s18, 1
        %s677 = smul.addr %s676, 7
        %s678 = smul.addr %s677, 8
        %s679 = scalar_lea.vmem %s3, %s678
        // Predicated region
        $region45: #{_generator_pallas.1} parent=31 // pred_check
          %p680 = pneg %p104
        $region46: #{_generator_pallas.1} parent=31 // pred_check_branch
          %682 = sbr.rel (%p680) target = $region48
        $region47: #{_generator_pallas.1} parent=31 // pred_region
          _
        $region48: #{_generator_pallas.1} parent=31 // pred_fallthru
          _
      $region32: #{_generator_pallas.1} parent=5 // pred_fallthru
        _
      %p683 = scmp.le.s32.totalorder 2, %s13
      // Predicated region
      $region49: #{_generator_pallas.1} parent=5 // pred_check
        %p684 = pneg %p683
      $region50: #{_generator_pallas.1} parent=5 // pred_check_branch
        %686 = sbr.rel (%p684) target = $region52
      $region51: #{_generator_pallas.1} parent=5 // pred_region
        %s687 = ssub.s32 %s13, 2
        // Predicated region
        $region53: #{_generator_pallas.1} parent=51 // pred_check
          %p688 = pneg %p110
        $region54: #{_generator_pallas.1} parent=51 // pred_check_branch
          %690 = sbr.rel (%p688) target = $region56
        $region55: #{_generator_pallas.1} parent=51 // pred_region
          %p691 = scmp.lt.s32.totalorder %s19, 1
          %s692 = scalar_select %p691, %s19, 1
          %s693 = smul.addr %s692, 7
          %s694 = smul.addr %s693, 8
          %s695 = scalar_lea.vmem %s3, %s694
        $region56: #{_generator_pallas.1} parent=51 // pred_fallthru
          _
      $region52: #{_generator_pallas.1} parent=5 // pred_fallthru
        _
    $region6: #{_generator_pallas.1} parent=1 // loop_footer
      %s17 = sadd.s32 1, %s13
    $region7: #{_generator_pallas.1} parent=1 // loop_footer_branch
      %12 = sbr.rel target = $region3
    $region8: #{_generator_pallas.1} parent=1 // loop_exit
      _
    %696 = vsyncpa [#allocation3], 1
    %s697 = scalar_lea.sflag [#allocation3], 1
    %698 = vsyncpa %s697, 1
    %699 = vsyncpa [#allocation5], 1

</llo_original>
